<compile_context>
chip_gen: v5e
topology: v5e:2x2
jax: 0.10.0
libtpu: 0.0.40
codegen_flags: <defaults>
</compile_context>

<pallas_src>
import functools

import jax
import jax.numpy as jnp
from jax.experimental import pallas as pl
from jax.experimental.pallas import tpu as pltpu


def _round_up(x: int, m: int) -> int:
    return ((x + m - 1) // m) * m


def mlp_kernel(x_ref, w1_ref, b1_ref, w2_ref, b2_ref, o_ref):
    # x_ref:  [TB, D_in]   bf16
    # w1_ref: [D_in, Hp]   bf16   (Hp = hidden padded to 128)
    # b1_ref: [1, Hp]      f32
    # w2_ref: [Hp, Np]     bf16   (Np = out padded to 128)
    # b2_ref: [1, Np]      f32
    # o_ref:  [TB, Np]     f32
    x = x_ref[...]
    h = jnp.dot(x, w1_ref[...], preferred_element_type=jnp.float32)
    h = jnp.tanh(h + b1_ref[...])                 # fp32 bias-add + tanh
    h = h.astype(jnp.bfloat16)                    # back to bf16 for the MXU
    out = jnp.dot(h, w2_ref[...], preferred_element_type=jnp.float32)
    out = out + b2_ref[...]
    o_ref[...] = out.astype(o_ref.dtype)


@functools.partial(jax.jit, static_argnames=("block_batch",))
def net_forward(x, w1, b1, w2, b2, *, block_batch=512):
    """Forward pass of Net.

    x : [B, 64] float32
    w1: [64, 30] float32 (stored as [in, out])
    b1: [1, 30]  float32
    w2: [30, 10] float32 (stored as [in, out])
    b2: [1, 10]  float32
    returns [B, 10] float32
    """
    B, d_in = x.shape
    hidden = w1.shape[1]
    d_out = w2.shape[1]

    # Lane-dense padding of the narrow dims (30 -> 128, 10 -> 128).
    h_pad = max(128, _round_up(hidden, 128))
    n_pad = max(128, _round_up(d_out, 128))

    # Batch tiling (sublane multiple of 8; pad batch up to a tile multiple).
    tb = min(block_batch, _round_up(B, 8))
    b_pad = _round_up(B, tb)
    num_tiles = b_pad // tb

    # Wrapper-side padding & dtype casts (weights are tiny: < 50 KB total).
    xp = jnp.zeros((b_pad, d_in), jnp.bfloat16).at[:B, :].set(
        x.astype(jnp.bfloat16))
    w1p = jnp.zeros((d_in, h_pad), jnp.bfloat16).at[:, :hidden].set(
        w1.astype(jnp.bfloat16))
    b1p = jnp.zeros((1, h_pad), jnp.float32).at[:, :hidden].set(b1)
    w2p = jnp.zeros((h_pad, n_pad), jnp.bfloat16).at[:hidden, :d_out].set(
        w2.astype(jnp.bfloat16))
    b2p = jnp.zeros((1, n_pad), jnp.float32).at[:, :d_out].set(b2)

    cost = pl.CostEstimate(
        flops=2 * b_pad * d_in * h_pad + 2 * b_pad * h_pad * n_pad,
        transcendentals=b_pad * h_pad,
        bytes_accessed=(xp.size * 2 + w1p.size * 2 + w2p.size * 2
                        + b1p.size * 4 + b2p.size * 4
                        + b_pad * n_pad * 4),
    )

    out_padded = pl.pallas_call(
        mlp_kernel,
        out_shape=jax.ShapeDtypeStruct((b_pad, n_pad), jnp.float32),
        grid_spec=pl.GridSpec(
            grid=(num_tiles,),
            in_specs=[
                # x: batch-blocked (double-buffered pipeline across tiles).
                pl.BlockSpec((tb, d_in), lambda i: (i, 0)),
                # Weights / biases: constant block index -> resident in VMEM.
                pl.BlockSpec((d_in, h_pad), lambda i: (0, 0)),
                pl.BlockSpec((1, h_pad), lambda i: (0, 0)),
                pl.BlockSpec((h_pad, n_pad), lambda i: (0, 0)),
                pl.BlockSpec((1, n_pad), lambda i: (0, 0)),
            ],
            out_specs=pl.BlockSpec((tb, n_pad), lambda i: (i, 0)),
        ),
        compiler_params=pltpu.CompilerParams(
            dimension_semantics=("parallel",),
        ),
        cost_estimate=cost,
    )(xp, w1p, b1p, w2p, b2p)

    return out_padded[:B, :d_out]


def init_params(key):
    # Deterministic init mimicking PyTorch nn.Linear default:
    # U(-1/sqrt(fan_in), 1/sqrt(fan_in)) for both weight and bias.
    k1, k2, k3, k4 = jax.random.split(key, 4)
    bound1 = 1.0 / jnp.sqrt(64.0)
    bound2 = 1.0 / jnp.sqrt(30.0)
    # stored as [in, out] (transpose of PyTorch's [out, in])
    w1 = jax.random.uniform(k1, (64, 30), jnp.float32, -bound1, bound1)
    b1 = jax.random.uniform(k2, (1, 30), jnp.float32, -bound1, bound1)
    w2 = jax.random.uniform(k3, (30, 10), jnp.float32, -bound2, bound2)
    b2 = jax.random.uniform(k4, (1, 10), jnp.float32, -bound2, bound2)
    return w1, b1, w2, b2


if __name__ == "__main__":
    key = jax.random.PRNGKey(0)
    kx, kp = jax.random.split(key)

    batch = 256  # small but enough rows to exercise batch tiling (2 tiles)
    x = jax.random.normal(kx, (batch, 64), jnp.float32)
    w1, b1, w2, b2 = init_params(kp)

    out = net_forward(x, w1, b1, w2, b2, block_batch=128)
    out = jax.block_until_ready(out)
    assert out.shape == (batch, 10)

    # Pure-JAX fp32 reference; kernel uses bf16 matmul operands with fp32
    # accumulation, so allow bf16-level tolerance.
    ref = jnp.tanh(x @ w1 + b1) @ w2 + b2
    assert jnp.allclose(out, ref, atol=3e-2, rtol=3e-2), (
        float(jnp.max(jnp.abs(out - ref))))

    print("KERNEL_OK")
</pallas_src>

<mosaic_0001>
module attributes {stable_mosaic.version = 11 : i64} {
  func.func @mlp_kernel(%arg0: i32, %arg1: memref<128x64xbf16, #tpu.memory_space<vmem>>, %arg2: memref<64x128xbf16, #tpu.memory_space<vmem>>, %arg3: memref<1x128xf32, #tpu.memory_space<vmem>>, %arg4: memref<128x128xbf16, #tpu.memory_space<vmem>>, %arg5: memref<1x128xf32, #tpu.memory_space<vmem>>, %arg6: memref<128x128xf32, #tpu.memory_space<vmem>>) attributes {dimension_semantics = [#tpu.dimension_semantics<parallel>], iteration_bounds = array<i64: 2>, scalar_prefetch = 0 : i64, scratch_operands = 0 : i64, tpu.core_type = #tpu.core_type<tc>, window_params = [{transform_indices = @transform_0, window_bounds = array<i64: 128, 64>}, {pipeline_mode = #tpu.pipeline_mode<synchronous>, transform_indices = @transform_1, window_bounds = array<i64: 64, 128>}, {pipeline_mode = #tpu.pipeline_mode<synchronous>, transform_indices = @transform_2, window_bounds = array<i64: 1, 128>}, {pipeline_mode = #tpu.pipeline_mode<synchronous>, transform_indices = @transform_3, window_bounds = array<i64: 128, 128>}, {pipeline_mode = #tpu.pipeline_mode<synchronous>, transform_indices = @transform_4, window_bounds = array<i64: 1, 128>}, {transform_indices = @transform_5, window_bounds = array<i64: 128, 128>}]} {
    %c0 = arith.constant 0 : index
    %c0_0 = arith.constant 0 : index
    %0 = vector.load %arg1[%c0, %c0_0] : memref<128x64xbf16, #tpu.memory_space<vmem>>, vector<128x64xbf16>
    %c0_1 = arith.constant 0 : index
    %c0_2 = arith.constant 0 : index
    %1 = vector.load %arg2[%c0_1, %c0_2] : memref<64x128xbf16, #tpu.memory_space<vmem>>, vector<64x128xbf16>
    %cst = arith.constant dense<0.000000e+00> : vector<128x128xf32>
    %2 = tpu.matmul %0, %1, %cst {dimension_numbers = #tpu.dot_dimension_numbers<[1], [0], [0], [1], [0, 0, 1, 1], [], []>} : vector<128x64xbf16>, vector<64x128xbf16>, vector<128x128xf32> -> vector<128x128xf32>
    %c0_3 = arith.constant 0 : index
    %c0_4 = arith.constant 0 : index
    %3 = vector.load %arg3[%c0_3, %c0_4] : memref<1x128xf32, #tpu.memory_space<vmem>>, vector<1x128xf32>
    %4 = vector.broadcast %3 : vector<1x128xf32> to vector<128x128xf32>
    %5 = arith.addf %2, %4 : vector<128x128xf32>
    %6 = math.tanh %5 : vector<128x128xf32>
    %7 = arith.truncf %6 : vector<128x128xf32> to vector<128x128xbf16>
    %c0_5 = arith.constant 0 : index
    %c0_6 = arith.constant 0 : index
    %8 = vector.load %arg4[%c0_5, %c0_6] : memref<128x128xbf16, #tpu.memory_space<vmem>>, vector<128x128xbf16>
    %cst_7 = arith.constant dense<0.000000e+00> : vector<128x128xf32>
    %9 = tpu.matmul %7, %8, %cst_7 {dimension_numbers = #tpu.dot_dimension_numbers<[1], [0], [0], [1], [0, 0, 1, 1], [], []>} : vector<128x128xbf16>, vector<128x128xbf16>, vector<128x128xf32> -> vector<128x128xf32>
    %c0_8 = arith.constant 0 : index
    %c0_9 = arith.constant 0 : index
    %10 = vector.load %arg5[%c0_8, %c0_9] : memref<1x128xf32, #tpu.memory_space<vmem>>, vector<1x128xf32>
    %11 = vector.broadcast %10 : vector<1x128xf32> to vector<128x128xf32>
    %12 = arith.addf %9, %11 : vector<128x128xf32>
    %c0_10 = arith.constant 0 : index
    %c0_11 = arith.constant 0 : index
    %13 = vector.load %arg6[%c0_10, %c0_11] : memref<128x128xf32, #tpu.memory_space<vmem>>, vector<128x128xf32>
    tpu.vector_store %arg6[%c0_10, %c0_11], %12 {strides = array<i32>} : memref<128x128xf32, #tpu.memory_space<vmem>>, vector<128x128xf32>,
    return
  }
  func.func @transform_0(%arg0: i32) -> (i32, i32) {
    %c0_i32 = arith.constant 0 : i32
    %c0_i32_0 = arith.constant 0 : i32
    return %arg0, %c0_i32 : i32, i32
  }
  func.func @transform_1(%arg0: i32) -> (i32, i32) {
    %c0_i32 = arith.constant 0 : i32
    %c0_i32_0 = arith.constant 0 : i32
    %c0_i32_1 = arith.constant 0 : i32
    return %c0_i32, %c0_i32_0 : i32, i32
  }
  func.func @transform_2(%arg0: i32) -> (i32, i32) {
    %c0_i32 = arith.constant 0 : i32
    %c0_i32_0 = arith.constant 0 : i32
    %c0_i32_1 = arith.constant 0 : i32
    return %c0_i32, %c0_i32_0 : i32, i32
  }
  func.func @transform_3(%arg0: i32) -> (i32, i32) {
    %c0_i32 = arith.constant 0 : i32
    %c0_i32_0 = arith.constant 0 : i32
    %c0_i32_1 = arith.constant 0 : i32
    return %c0_i32, %c0_i32_0 : i32, i32
  }
  func.func @transform_4(%arg0: i32) -> (i32, i32) {
    %c0_i32 = arith.constant 0 : i32
    %c0_i32_0 = arith.constant 0 : i32
    %c0_i32_1 = arith.constant 0 : i32
    return %c0_i32, %c0_i32_0 : i32, i32
  }
  func.func @transform_5(%arg0: i32) -> (i32, i32) {
    %c0_i32 = arith.constant 0 : i32
    %c0_i32_0 = arith.constant 0 : i32
    return %arg0, %c0_i32 : i32, i32
  }
}

</mosaic_0001>

<llo_original>
// kernel: net_forward.1
$region0: #{net_forward.1}
  #allocation0 [shape = 'u32[]', space=smem, size = 0x4, offset = 0x4, fixed_abs, tag = 'smem constant byte address 0x4 - core index']
  #allocation1 [shape = 'u32[72,128]{1,0:T(1,128)}', space=vmem, size = 0x9000, scoped, tag = 'internal scratch']
  %s0 = inlined_call_operand.vmem [shape: bf16[256,64], index: 0, kind: input, shape index: {}]
  %s1 = inlined_call_operand.vmem [shape: bf16[64,128], index: 1, kind: input, shape index: {}]
  %s2 = inlined_call_operand.vmem [shape: f32[1,128], index: 2, kind: input, shape index: {}]
  %s3 = inlined_call_operand.vmem [shape: bf16[128,128], index: 3, kind: input, shape index: {}]
  %s4 = inlined_call_operand.vmem [shape: f32[1,128], index: 4, kind: input, shape index: {}]
  %s5 = inlined_call_operand.vmem [shape: f32[256,128], index: 5, kind: output, shape index: {}]
  %s6 = sld [smem:[#allocation0]]
  $region53: #{net_forward.1} parent=0
    _
  %s8 = ssub.s32 1, %s6
  %s9 = scalar_select 0, %s8, %s6
  loop: start=0, step=1, limit=4
  $region2: #{net_forward.1} parent=0 // loop_pre_header
    _
  $region3: #{net_forward.1} parent=0 // loop_header
    %s11 = sphi 0, %s15
    %p12 = scmp.ge.s32.totalorder %s11, 4
    %s21 = sphi 0, %s23
    %s24 = sphi 0, %s21
    %s25 = sphi 0, %s24
    %s41 = sphi 0, %s25
    %s45 = sphi 0, %s45
    %s47 = sphi 0, %s45
    %s48 = sphi 0, %s47
    %s62 = sphi 0, %s48
    %s66 = sphi 0, %s66
    %s68 = sphi 0, %s66
    %s69 = sphi 0, %s68
    %s83 = sphi 0, %s69
    %s87 = sphi 0, %s87
    %s89 = sphi 0, %s87
    %s90 = sphi 0, %s89
    %s104 = sphi 0, %s90
    %s108 = sphi 0, %s108
    %s110 = sphi 0, %s108
    %s111 = sphi 0, %s110
    %s125 = sphi 0, %s111
    %s131 = sphi 0, %s133
    %s134 = sphi 0, %s131
    %s135 = sphi 0, %s134
    %s151 = sphi 0, %s135
  $region4: #{net_forward.1} parent=0 // loop_header_branch
    %14 = sbr.rel (%p12) target = $region8
  $region5: #{net_forward.1} parent=0 // loop_body
    %s16 = ssub.s32 %s11, 1
    %s17 = ssub.s32 %s11, 2
    %s18 = sadd.s32 %s11, 1
    %s19 = ssub.s32 %s11, %s18
    %p20 = scmp.eq.s32.totalorder %s19, 0
    %s22 = sadd.s32 %s21, 1
    %s23 = scalar_select %p20, %s21, %s22
    %p26 = pneg %p20
    %p27 = scmp.eq.s32.totalorder %s11, 1
    %p28 = por %p26, %p27
    %p29 = scmp.ne.s32.totalorder %s21, %s24
    %p30 = scmp.eq.s32.totalorder %s11, 0
    %p31 = por %p29, %p30
    %p32 = scmp.ne.s32.totalorder %s21, %s24
    %p33 = scmp.eq.s32.totalorder %s16, 1
    %p34 = por %p32, %p33
    %p35 = scmp.ne.s32.totalorder %s24, %s25
    %p36 = scmp.eq.s32.totalorder %s16, 0
    %p37 = por %p35, %p36
    %p38 = scmp.ne.s32.totalorder %s24, %s25
    %p39 = scmp.eq.s32.totalorder %s17, 1
    %p40 = por %p38, %p39
    %p42 = scmp.ne.s32.totalorder %s25, %s41
    %p43 = scmp.eq.s32.totalorder %s17, 0
    %p44 = por %p42, %p43
    %s46 = sadd.s32 %s45, 1
    %p49 = scmp.eq.s32.totalorder %s11, 1
    %p50 = scmp.ne.s32.totalorder %s45, %s47
    %p51 = scmp.eq.s32.totalorder %s11, 0
    %p52 = por %p50, %p51
    %p53 = scmp.ne.s32.totalorder %s45, %s47
    %p54 = scmp.eq.s32.totalorder %s16, 1
    %p55 = por %p53, %p54
    %p56 = scmp.ne.s32.totalorder %s47, %s48
    %p57 = scmp.eq.s32.totalorder %s16, 0
    %p58 = por %p56, %p57
    %p59 = scmp.ne.s32.totalorder %s47, %s48
    %p60 = scmp.eq.s32.totalorder %s17, 1
    %p61 = por %p59, %p60
    %p63 = scmp.ne.s32.totalorder %s48, %s62
    %p64 = scmp.eq.s32.totalorder %s17, 0
    %p65 = por %p63, %p64
    %s67 = sadd.s32 %s66, 1
    %p70 = scmp.eq.s32.totalorder %s11, 1
    %p71 = scmp.ne.s32.totalorder %s66, %s68
    %p72 = scmp.eq.s32.totalorder %s11, 0
    %p73 = por %p71, %p72
    %p74 = scmp.ne.s32.totalorder %s66, %s68
    %p75 = scmp.eq.s32.totalorder %s16, 1
    %p76 = por %p74, %p75
    %p77 = scmp.ne.s32.totalorder %s68, %s69
    %p78 = scmp.eq.s32.totalorder %s16, 0
    %p79 = por %p77, %p78
    %p80 = scmp.ne.s32.totalorder %s68, %s69
    %p81 = scmp.eq.s32.totalorder %s17, 1
    %p82 = por %p80, %p81
    %p84 = scmp.ne.s32.totalorder %s69, %s83
    %p85 = scmp.eq.s32.totalorder %s17, 0
    %p86 = por %p84, %p85
    %s88 = sadd.s32 %s87, 1
    %p91 = scmp.eq.s32.totalorder %s11, 1
    %p92 = scmp.ne.s32.totalorder %s87, %s89
    %p93 = scmp.eq.s32.totalorder %s11, 0
    %p94 = por %p92, %p93
    %p95 = scmp.ne.s32.totalorder %s87, %s89
    %p96 = scmp.eq.s32.totalorder %s16, 1
    %p97 = por %p95, %p96
    %p98 = scmp.ne.s32.totalorder %s89, %s90
    %p99 = scmp.eq.s32.totalorder %s16, 0
    %p100 = por %p98, %p99
    %p101 = scmp.ne.s32.totalorder %s89, %s90
    %p102 = scmp.eq.s32.totalorder %s17, 1
    %p103 = por %p101, %p102
    %p105 = scmp.ne.s32.totalorder %s90, %s104
    %p106 = scmp.eq.s32.totalorder %s17, 0
    %p107 = por %p105, %p106
    %s109 = sadd.s32 %s108, 1
    %p112 = scmp.eq.s32.totalorder %s11, 1
    %p113 = scmp.ne.s32.totalorder %s108, %s110
    %p114 = scmp.eq.s32.totalorder %s11, 0
    %p115 = por %p113, %p114
    %p116 = scmp.ne.s32.totalorder %s108, %s110
    %p117 = scmp.eq.s32.totalorder %s16, 1
    %p118 = por %p116, %p117
    %p119 = scmp.ne.s32.totalorder %s110, %s111
    %p120 = scmp.eq.s32.totalorder %s16, 0
    %p121 = por %p119, %p120
    %p122 = scmp.ne.s32.totalorder %s110, %s111
    %p123 = scmp.eq.s32.totalorder %s17, 1
    %p124 = por %p122, %p123
    %p126 = scmp.ne.s32.totalorder %s111, %s125
    %p127 = scmp.eq.s32.totalorder %s17, 0
    %p128 = por %p126, %p127
    %s129 = ssub.s32 %s11, %s18
    %p130 = scmp.eq.s32.totalorder %s129, 0
    %s132 = sadd.s32 %s131, 1
    %s133 = scalar_select %p130, %s131, %s132
    %p136 = pneg %p130
    %p137 = scmp.eq.s32.totalorder %s11, 1
    %p138 = por %p136, %p137
    %p139 = scmp.ne.s32.totalorder %s131, %s134
    %p140 = scmp.eq.s32.totalorder %s11, 0
    %p141 = por %p139, %p140
    %p142 = scmp.ne.s32.totalorder %s131, %s134
    %p143 = scmp.eq.s32.totalorder %s16, 1
    %p144 = por %p142, %p143
    %p145 = scmp.ne.s32.totalorder %s134, %s135
    %p146 = scmp.eq.s32.totalorder %s16, 0
    %p147 = por %p145, %p146
    %p148 = scmp.ne.s32.totalorder %s134, %s135
    %p149 = scmp.eq.s32.totalorder %s17, 1
    %p150 = por %p148, %p149
    %p152 = scmp.ne.s32.totalorder %s135, %s151
    %p153 = scmp.eq.s32.totalorder %s17, 0
    %p154 = por %p152, %p153
    %p155 = scmp.le.s32.totalorder 1, %s11
    %p156 = scmp.lt.s32.totalorder %s11, 3
    %p157 = pnand %p155, %p156
    %p158 = pneg %p157
    // Predicated region
    $region9: #{net_forward.1} parent=5 // pred_check
      _
    $region10: #{net_forward.1} parent=5 // pred_check_branch
      %160 = sbr.rel (%p157) target = $region12
    $region11: #{net_forward.1} parent=5 // pred_region
      %s161 = ssub.s32 %s11, 1
      // Predicated region
      $region13: #{net_forward.1} parent=11 // pred_check
        %p162 = pneg %p58
      $region14: #{net_forward.1} parent=11 // pred_check_branch
        %164 = sbr.rel (%p162) target = $region16
      $region15: #{net_forward.1} parent=11 // pred_region
        _
      $region16: #{net_forward.1} parent=11 // pred_fallthru
        _
      // Predicated region
      $region17: #{net_forward.1} parent=11 // pred_check
        %p165 = pneg %p79
      $region18: #{net_forward.1} parent=11 // pred_check_branch
        %167 = sbr.rel (%p165) target = $region20
      $region19: #{net_forward.1} parent=11 // pred_region
        _
      $region20: #{net_forward.1} parent=11 // pred_fallthru
        _
      // Predicated region
      $region21: #{net_forward.1} parent=11 // pred_check
        %p168 = pneg %p100
      $region22: #{net_forward.1} parent=11 // pred_check_branch
        %170 = sbr.rel (%p168) target = $region24
      $region23: #{net_forward.1} parent=11 // pred_region
        _
      $region24: #{net_forward.1} parent=11 // pred_fallthru
        _
      // Predicated region
      $region25: #{net_forward.1} parent=11 // pred_check
        %p171 = pneg %p121
      $region26: #{net_forward.1} parent=11 // pred_check_branch
        %173 = sbr.rel (%p171) target = $region28
      $region27: #{net_forward.1} parent=11 // pred_region
        _
      $region28: #{net_forward.1} parent=11 // pred_fallthru
        _
    $region12: #{net_forward.1} parent=5 // pred_fallthru
      _
    %p174 = scmp.lt.s32.totalorder %s11, 2
    // Predicated region
    $region29: #{net_forward.1} parent=5 // pred_check
      %p175 = pneg %p174
    $region30: #{net_forward.1} parent=5 // pred_check_branch
      %177 = sbr.rel (%p175) target = $region32
    $region31: #{net_forward.1} parent=5 // pred_region
      // Predicated region
      $region33: #{net_forward.1} parent=31 // pred_check
        %p178 = pneg %p31
      $region34: #{net_forward.1} parent=31 // pred_check_branch
        %180 = sbr.rel (%p178) target = $region36
      $region35: #{net_forward.1} parent=31 // pred_region
        %s181 = smul.u32 16, %s11
        %p182 = scmp.lt.s32.totalorder %s181, 31
        %s183 = scalar_select %p182, %s181, 31
        %s184 = smul.addr %s183, 4
        %s185 = scalar_lea.vmem %s0, %s184
        %s186 = smul.u32 16, %s11
      $region36: #{net_forward.1} parent=31 // pred_fallthru
        _
    $region32: #{net_forward.1} parent=5 // pred_fallthru
      _
    %p187 = scmp.le.s32.totalorder 1, %s11
    %p188 = scmp.lt.s32.totalorder %s11, 3
    %p189 = pnand %p187, %p188
    %p190 = pneg %p189
    // Predicated region
    $region37: #{net_forward.1} parent=5 // pred_check
      _
    $region38: #{net_forward.1} parent=5 // pred_check_branch
      %192 = sbr.rel (%p189) target = $region40
    $region39: #{net_forward.1} parent=5 // pred_region
      %s193 = ssub.s32 %s11, 1
      %s194 = smul.u32 16, %s16
      %p195 = scmp.lt.s32.totalorder %s194, 31
      %s196 = scalar_select %p195, %s194, 31
      %s197 = smul.addr %s196, 4
      %s198 = scalar_lea.vmem %s0, %s197
      %p199 = pneg %p37
      %p200 = pneg %p34
      %p201 = pneg %p58
      %p202 = pneg %p55
      %p203 = pneg %p79
      %p204 = pneg %p76
      %p205 = pneg %p100
      %p206 = pneg %p97
      %p207 = pneg %p121
      %p208 = pneg %p118
      %p209 = pneg %p147
      %p210 = pneg %p144
      %s211 = smul.u32 16, %s16
      %p212 = scmp.lt.s32.totalorder %s211, 31
      %s213 = scalar_select %p212, %s211, 31
      %s214 = smul.addr %s213, 8
      %s215 = scalar_lea.vmem %s5, %s214
      %s216 = smul.u32 16, %s16
      %p217 = scmp.lt.s32.totalorder %s216, 31
      %s218 = scalar_select %p217, %s216, 31
      %s219 = smul.addr %s218, 4
      %s220 = scalar_lea.vmem %s0, %s219
      %s221 = smul.u32 16, %s16
      %s222 = smul.u32 16, %s16
      %p223 = scmp.lt.s32.totalorder %s222, 31
      %s224 = scalar_select %p223, %s222, 31
      %s225 = smul.addr %s224, 8
      %s226 = scalar_lea.vmem %s5, %s225
      %s227 = smul.u32 16, %s16
      %v229 = vld [vmem:[%s220] sm:$0xf]
      %v230 = vld [vmem:[%s220 + $0x4] sm:$0xf]
      %v231 = vld [vmem:[%s220 + $0x8] sm:$0xf]
      %v232 = vld [vmem:[%s220 + $0xc] sm:$0xf]
      %v233 = vld [vmem:[%s220 + $0x10] sm:$0xf]
      %v234 = vld [vmem:[%s220 + $0x14] sm:$0xf]
      %v235 = vld [vmem:[%s220 + $0x18] sm:$0xf]
      %v236 = vld [vmem:[%s220 + $0x1c] sm:$0xf]
      %v237 = vld [vmem:[%s220 + $0x20] sm:$0xf]
      %v238 = vld [vmem:[%s220 + $0x24] sm:$0xf]
      %v239 = vld [vmem:[%s220 + $0x28] sm:$0xf]
      %v240 = vld [vmem:[%s220 + $0x2c] sm:$0xf]
      %v241 = vld [vmem:[%s220 + $0x30] sm:$0xf]
      %v242 = vld [vmem:[%s220 + $0x34] sm:$0xf]
      %v243 = vld [vmem:[%s220 + $0x38] sm:$0xf]
      %v244 = vld [vmem:[%s220 + $0x3c] sm:$0xf]
      %v245 = vld [vmem:[%s1] sm:$0xf]
      %v246 = vld [vmem:[%s1 + $0x4] sm:$0xf]
      %v247 = vld [vmem:[%s1 + $0x8] sm:$0xf]
      %v248 = vld [vmem:[%s1 + $0xc] sm:$0xf]
      %v249 = vld [vmem:[%s1 + $0x10] sm:$0xf]
      %v250 = vld [vmem:[%s1 + $0x14] sm:$0xf]
      %v251 = vld [vmem:[%s1 + $0x18] sm:$0xf]
      %v252 = vld [vmem:[%s1 + $0x1c] sm:$0xf]
      %v253 = vld [vmem:[%s2] sm:$0x1]
      %v255 = vperm.slane %v253, 0
      %v273 = vunpack.c.l.b16 %v229
      %v274 = vunpack.c.l.b16 %v230
      %v275 = vunpack.c.l.b16 %v231
      %v276 = vunpack.c.l.b16 %v232
      %v277 = vunpack.c.l.b16 %v233
      %v278 = vunpack.c.l.b16 %v234
      %v279 = vunpack.c.l.b16 %v235
      %v280 = vunpack.c.l.b16 %v236
      %v281 = vunpack.c.l.b16 %v237
      %v282 = vunpack.c.l.b16 %v238
      %v283 = vunpack.c.l.b16 %v239
      %v284 = vunpack.c.l.b16 %v240
      %v285 = vunpack.c.l.b16 %v241
      %v286 = vunpack.c.l.b16 %v242
      %v287 = vunpack.c.l.b16 %v243
      %v288 = vunpack.c.l.b16 %v244
      %v289 = vpack.c.b16 %v274, %v273
      %v290 = vpack.c.b16 %v276, %v275
      %v291 = vpack.c.b16 %v278, %v277
      %v292 = vpack.c.b16 %v280, %v279
      %v293 = vpack.c.b16 %v282, %v281
      %v294 = vpack.c.b16 %v284, %v283
      %v295 = vpack.c.b16 %v286, %v285
      %v296 = vpack.c.b16 %v288, %v287
      %v305 = vunpack.c.l.b16 %v245
      %v306 = vunpack.c.l.b16 %v246
      %v307 = vunpack.c.l.b16 %v247
      %v308 = vunpack.c.l.b16 %v248
      %v309 = vunpack.c.l.b16 %v249
      %v310 = vunpack.c.l.b16 %v250
      %v311 = vunpack.c.l.b16 %v251
      %v312 = vunpack.c.l.b16 %v252
      %v313 = vpack.c.b16 %v306, %v305
      %v314 = vpack.c.b16 %v308, %v307
      %v315 = vpack.c.b16 %v310, %v309
      %v316 = vpack.c.b16 %v312, %v311
      %vm321 = vcmask 523264
      %v323 = vsel %vm321, %v289, 0
      %v326 = vsel %vm321, %v290, 0
      %v329 = vsel %vm321, %v291, 0
      %v332 = vsel %vm321, %v292, 0
      %v335 = vsel %vm321, %v293, 0
      %v338 = vsel %vm321, %v294, 0
      %v341 = vsel %vm321, %v295, 0
      %v344 = vsel %vm321, %v296, 0
      %346 = vmatpush.bf16.msra.mxu0 0
      %347 = vmatpush.bf16.msra.mxu0 0
      %348 = vmatpush.bf16.msra.mxu0 0
      %349 = vmatpush.bf16.msra.mxu0 0
      %350 = vmatpush.bf16.msra.mxu0 %v316
      %351 = vmatpush.bf16.msra.mxu0 %v315
      %352 = vmatpush.bf16.msra.mxu0 %v314
      %353 = vmatpush.bf16.msra.mxu0 %v313
      %354 = vmatmul.bf16.gmra.mxu0 %v323
      %v355 = vpop.f32.mrf.mxu0
      %v356 = vadd.f32 %v255, %v355
      %v357 = vpop.f32.mrf.mxu0
      %v358 = vadd.f32 %v255, %v357
      %359 = vmatmul.bf16.gmra.mxu0 %v326
      %v360 = vpop.f32.mrf.mxu0
      %v361 = vadd.f32 %v255, %v360
      %v362 = vpop.f32.mrf.mxu0
      %v363 = vadd.f32 %v255, %v362
      %364 = vmatmul.bf16.gmra.mxu0 %v329
      %v365 = vpop.f32.mrf.mxu0
      %v366 = vadd.f32 %v255, %v365
      %v367 = vpop.f32.mrf.mxu0
      %v368 = vadd.f32 %v255, %v367
      %369 = vmatmul.bf16.gmra.mxu0 %v332
      %v370 = vpop.f32.mrf.mxu0
      %v371 = vadd.f32 %v255, %v370
      %v372 = vpop.f32.mrf.mxu0
      %v373 = vadd.f32 %v255, %v372
      %374 = vmatmul.bf16.gmra.mxu0 %v335
      %v375 = vpop.f32.mrf.mxu0
      %v376 = vadd.f32 %v255, %v375
      %v377 = vpop.f32.mrf.mxu0
      %v378 = vadd.f32 %v255, %v377
      %379 = vmatmul.bf16.gmra.mxu0 %v338
      %v380 = vpop.f32.mrf.mxu0
      %v381 = vadd.f32 %v255, %v380
      %v382 = vpop.f32.mrf.mxu0
      %v383 = vadd.f32 %v255, %v382
      %384 = vmatmul.bf16.gmra.mxu0 %v341
      %v385 = vpop.f32.mrf.mxu0
      %v386 = vadd.f32 %v255, %v385
      %v387 = vpop.f32.mrf.mxu0
      %v388 = vadd.f32 %v255, %v387
      %389 = vmatmul.bf16.gmra.mxu0 %v344
      %v390 = vpop.f32.mrf.mxu0
      %v391 = vadd.f32 %v255, %v390
      %v392 = vpop.f32.mrf.mxu0
      %v393 = vadd.f32 %v255, %v392
      %394 = vdwg.mxu0
      %v395 = vtanh.pop %v356
      %v396 = vtanh.pop %v358
      %v397 = vtanh.pop %v361
      %v398 = vtanh.pop %v363
      %v399 = vtanh.pop %v366
      %v400 = vtanh.pop %v368
      %v401 = vtanh.pop %v371
      %v402 = vtanh.pop %v373
      %v403 = vtanh.pop %v376
      %v404 = vtanh.pop %v378
      %v405 = vtanh.pop %v381
      %v406 = vtanh.pop %v383
      %v407 = vtanh.pop %v386
      %v408 = vtanh.pop %v388
      %v409 = vtanh.pop %v391
      %v410 = vtanh.pop %v393
      %v411 = vpack.c.bf16 %v396, %v395
      %v412 = vpack.c.bf16 %v398, %v397
      %v413 = vpack.c.bf16 %v400, %v399
      %v414 = vpack.c.bf16 %v402, %v401
      %v415 = vpack.c.bf16 %v404, %v403
      %v416 = vpack.c.bf16 %v406, %v405
      %v417 = vpack.c.bf16 %v408, %v407
      %v418 = vpack.c.bf16 %v410, %v409
      %v419 = vld [vmem:[%s3] sm:$0xf]
      %v420 = vld [vmem:[%s3 + $0x4] sm:$0xf]
      %v421 = vld [vmem:[%s3 + $0x8] sm:$0xf]
      %v422 = vld [vmem:[%s3 + $0xc] sm:$0xf]
      %v423 = vld [vmem:[%s3 + $0x10] sm:$0xf]
      %v424 = vld [vmem:[%s3 + $0x14] sm:$0xf]
      %v425 = vld [vmem:[%s3 + $0x18] sm:$0xf]
      %v426 = vld [vmem:[%s3 + $0x1c] sm:$0xf]
      %v427 = vld [vmem:[%s3 + $0x20] sm:$0xf]
      %v428 = vld [vmem:[%s3 + $0x24] sm:$0xf]
      %v429 = vld [vmem:[%s3 + $0x28] sm:$0xf]
      %v430 = vld [vmem:[%s3 + $0x2c] sm:$0xf]
      %v431 = vld [vmem:[%s3 + $0x30] sm:$0xf]
      %v432 = vld [vmem:[%s3 + $0x34] sm:$0xf]
      %v433 = vld [vmem:[%s3 + $0x38] sm:$0xf]
      %v434 = vld [vmem:[%s3 + $0x3c] sm:$0xf]
      %v435 = vld [vmem:[%s4] sm:$0x1]
      %v437 = vperm.slane %v435, 0
      %v455 = vunpack.c.l.b16 %v419
      %v456 = vunpack.c.l.b16 %v420
      %v457 = vunpack.c.l.b16 %v421
      %v458 = vunpack.c.l.b16 %v422
      %v459 = vunpack.c.l.b16 %v423
      %v460 = vunpack.c.l.b16 %v424
      %v461 = vunpack.c.l.b16 %v425
      %v462 = vunpack.c.l.b16 %v426
      %v463 = vunpack.c.l.b16 %v427
      %v464 = vunpack.c.l.b16 %v428
      %v465 = vunpack.c.l.b16 %v429
      %v466 = vunpack.c.l.b16 %v430
      %v467 = vunpack.c.l.b16 %v431
      %v468 = vunpack.c.l.b16 %v432
      %v469 = vunpack.c.l.b16 %v433
      %v470 = vunpack.c.l.b16 %v434
      %v471 = vpack.c.b16 %v456, %v455
      %v472 = vpack.c.b16 %v458, %v457
      %v473 = vpack.c.b16 %v460, %v459
      %v474 = vpack.c.b16 %v462, %v461
      %v475 = vpack.c.b16 %v464, %v463
      %v476 = vpack.c.b16 %v466, %v465
      %v477 = vpack.c.b16 %v468, %v467
      %v478 = vpack.c.b16 %v470, %v469
      %487 = vmatpush.bf16.msra.mxu0 %v478
      %488 = vmatpush.bf16.msra.mxu0 %v477
      %489 = vmatpush.bf16.msra.mxu0 %v476
      %490 = vmatpush.bf16.msra.mxu0 %v475
      %491 = vmatpush.bf16.msra.mxu0 %v474
      %492 = vmatpush.bf16.msra.mxu0 %v473
      %493 = vmatpush.bf16.msra.mxu0 %v472
      %494 = vmatpush.bf16.msra.mxu0 %v471
      %495 = vmatmul.bf16.gmra.mxu0 %v411
      %v496 = vpop.f32.mrf.mxu0
      %v497 = vadd.f32 %v437, %v496
      %v498 = vpop.f32.mrf.mxu0
      %v499 = vadd.f32 %v437, %v498
      %500 = vmatmul.bf16.gmra.mxu0 %v412
      %v501 = vpop.f32.mrf.mxu0
      %v502 = vadd.f32 %v437, %v501
      %v503 = vpop.f32.mrf.mxu0
      %v504 = vadd.f32 %v437, %v503
      %505 = vmatmul.bf16.gmra.mxu0 %v413
      %v506 = vpop.f32.mrf.mxu0
      %v507 = vadd.f32 %v437, %v506
      %v508 = vpop.f32.mrf.mxu0
      %v509 = vadd.f32 %v437, %v508
      %510 = vmatmul.bf16.gmra.mxu0 %v414
      %v511 = vpop.f32.mrf.mxu0
      %v512 = vadd.f32 %v437, %v511
      %v513 = vpop.f32.mrf.mxu0
      %v514 = vadd.f32 %v437, %v513
      %515 = vmatmul.bf16.gmra.mxu0 %v415
      %v516 = vpop.f32.mrf.mxu0
      %v517 = vadd.f32 %v437, %v516
      %v518 = vpop.f32.mrf.mxu0
      %v519 = vadd.f32 %v437, %v518
      %520 = vmatmul.bf16.gmra.mxu0 %v416
      %v521 = vpop.f32.mrf.mxu0
      %v522 = vadd.f32 %v437, %v521
      %v523 = vpop.f32.mrf.mxu0
      %v524 = vadd.f32 %v437, %v523
      %525 = vmatmul.bf16.gmra.mxu0 %v417
      %v526 = vpop.f32.mrf.mxu0
      %v527 = vadd.f32 %v437, %v526
      %v528 = vpop.f32.mrf.mxu0
      %v529 = vadd.f32 %v437, %v528
      %530 = vmatmul.bf16.gmra.mxu0 %v418
      %v531 = vpop.f32.mrf.mxu0
      %v532 = vadd.f32 %v437, %v531
      %v533 = vpop.f32.mrf.mxu0
      %v534 = vadd.f32 %v437, %v533
      %535 = vdwg.mxu0
      %536 = vst [vmem:[%s226] sm:$0xff] %v497
      %537 = vst [vmem:[%s226 + $0x8] sm:$0xff] %v499
      %538 = vst [vmem:[%s226 + $0x10] sm:$0xff] %v502
      %539 = vst [vmem:[%s226 + $0x18] sm:$0xff] %v504
      %540 = vst [vmem:[%s226 + $0x20] sm:$0xff] %v507
      %541 = vst [vmem:[%s226 + $0x28] sm:$0xff] %v509
      %542 = vst [vmem:[%s226 + $0x30] sm:$0xff] %v512
      %543 = vst [vmem:[%s226 + $0x38] sm:$0xff] %v514
      %544 = vst [vmem:[%s226 + $0x40] sm:$0xff] %v517
      %545 = vst [vmem:[%s226 + $0x48] sm:$0xff] %v519
      %546 = vst [vmem:[%s226 + $0x50] sm:$0xff] %v522
      %547 = vst [vmem:[%s226 + $0x58] sm:$0xff] %v524
      %548 = vst [vmem:[%s226 + $0x60] sm:$0xff] %v527
      %549 = vst [vmem:[%s226 + $0x68] sm:$0xff] %v529
      %550 = vst [vmem:[%s226 + $0x70] sm:$0xff] %v532
      %551 = vst [vmem:[%s226 + $0x78] sm:$0xff] %v534
      %s552 = smul.u32 16, %s16
      %p553 = scmp.lt.s32.totalorder %s552, 31
      %s554 = scalar_select %p553, %s552, 31
      %s555 = smul.addr %s554, 8
      %s556 = scalar_lea.vmem %s5, %s555
      // Predicated region
      $region41: #{net_forward.1} parent=39 // pred_check
        %p557 = pneg %p144
      $region42: #{net_forward.1} parent=39 // pred_check_branch
        %559 = sbr.rel (%p557) target = $region44
      $region43: #{net_forward.1} parent=39 // pred_region
        %s560 = smul.u32 16, %s16
      $region44: #{net_forward.1} parent=39 // pred_fallthru
        _
    $region40: #{net_forward.1} parent=5 // pred_fallthru
      _
    %p561 = scmp.le.s32.totalorder 2, %s11
    // Predicated region
    $region45: #{net_forward.1} parent=5 // pred_check
      %p562 = pneg %p561
    $region46: #{net_forward.1} parent=5 // pred_check_branch
      %564 = sbr.rel (%p562) target = $region48
    $region47: #{net_forward.1} parent=5 // pred_region
      %s565 = ssub.s32 %s11, 2
      // Predicated region
      $region49: #{net_forward.1} parent=47 // pred_check
        %p566 = pneg %p150
      $region50: #{net_forward.1} parent=47 // pred_check_branch
        %568 = sbr.rel (%p566) target = $region52
      $region51: #{net_forward.1} parent=47 // pred_region
        %s569 = smul.u32 16, %s17
        %p570 = scmp.lt.s32.totalorder %s569, 31
        %s571 = scalar_select %p570, %s569, 31
        %s572 = smul.addr %s571, 8
        %s573 = scalar_lea.vmem %s5, %s572
      $region52: #{net_forward.1} parent=47 // pred_fallthru
        _
    $region48: #{net_forward.1} parent=5 // pred_fallthru
      _
  $region6: #{net_forward.1} parent=0 // loop_footer
    %s15 = sadd.s32 1, %s11
  $region7: #{net_forward.1} parent=0 // loop_footer_branch
    %10 = sbr.rel target = $region3
  $region8: #{net_forward.1} parent=0 // loop_exit
    _

</llo_original>
